<compile_context>
chip_gen: v6e
topology: v6e:2x2x1
jax: 0.10.0
libtpu: 0.0.40
codegen_flags: <defaults>
</compile_context>

<pallas_src>
import functools

import jax
import jax.numpy as jnp
from jax.experimental import pallas as pl
from jax.experimental.pallas import tpu as pltpu

LANE = 128  # vreg lane width


def _round_up(n, m):
    return ((n + m - 1) // m) * m


def mlp_kernel(x_ref, w1_ref, b1_ref, w2_ref, b2_ref, w3_ref, b3_ref, o_ref):
    """One (TM, 128) batch tile through three fused matmul+sigmoid stages.

    Weight/bias refs map to block (0, 0) for every grid step, so they are
    loaded into VMEM once and stay resident across the whole batch grid.
    """
    def sigmoid(z):
        # exp lands on the EUP slot; the divide is a minor VPU cost at these
        # shapes (kernel is launch/DMA bound, not VPU bound).
        return 1.0 / (1.0 + jnp.exp(-z))

    x = x_ref[...]
    b1 = b1_ref[...]  # hoisted: read each bias once per tile
    b2 = b2_ref[...]
    b3 = b3_ref[...]

    h1 = sigmoid(jnp.dot(x, w1_ref[...], preferred_element_type=jnp.float32) + b1)
    h2 = sigmoid(jnp.dot(h1, w2_ref[...], preferred_element_type=jnp.float32) + b2)
    h3 = jnp.dot(h2, w3_ref[...], preferred_element_type=jnp.float32) + b3
    o_ref[...] = sigmoid(h3).astype(o_ref.dtype)


def pad_params(params):
    """One-time zero-padding of every Linear to lane-dense (128-mult) dims."""
    w1, b1, w2, b2, w3, b3 = params

    def pad_w(w):
        fi, fo = w.shape
        return jnp.pad(w, ((0, _round_up(fi, LANE) - fi),
                           (0, _round_up(fo, LANE) - fo)))

    def pad_b(b):
        fo = b.shape[-1]
        return jnp.pad(b.reshape(1, fo), ((0, 0), (0, _round_up(fo, LANE) - fo)))

    return (pad_w(w1), pad_b(b1), pad_w(w2), pad_b(b2), pad_w(w3), pad_b(b3))


@functools.partial(jax.jit, static_argnames=("d_in", "d_out"))
def custom_model_forward(x, padded_params, d_in, d_out):
    w1, b1, w2, b2, w3, b3 = padded_params
    batch = x.shape[0]
    d_in_pad = w1.shape[0]
    d_out_pad = w3.shape[1]

    # Batch tile: multiple of 8 (f32 sublane), capped at 256 rows per step.
    tm = min(256, _round_up(batch, 8))
    batch_pad = _round_up(batch, tm)
    grid = (batch_pad // tm,)

    x_pad = jnp.pad(x.astype(jnp.float32),
                    ((0, batch_pad - batch), (0, d_in_pad - d_in)))

    x_spec = pl.BlockSpec((tm, d_in_pad), lambda i: (i, 0))
    out_spec = pl.BlockSpec((tm, d_out_pad), lambda i: (i, 0))

    def resident(shape):
        # Full array, same block every grid step -> stays in VMEM.
        return pl.BlockSpec(shape, lambda i: (0, 0))

    flops = 2 * batch_pad * (w1.shape[0] * w1.shape[1]
                             + w2.shape[0] * w2.shape[1]
                             + w3.shape[0] * w3.shape[1])
    transcendentals = batch_pad * (w1.shape[1] + w2.shape[1] + w3.shape[1])
    bytes_accessed = 4 * (x_pad.size + w1.size + b1.size + w2.size + b2.size
                          + w3.size + b3.size + batch_pad * d_out_pad)

    out = pl.pallas_call(
        mlp_kernel,
        out_shape=jax.ShapeDtypeStruct((batch_pad, d_out_pad), jnp.float32),
        grid=grid,
        in_specs=[
            x_spec,
            resident(w1.shape), resident(b1.shape),
            resident(w2.shape), resident(b2.shape),
            resident(w3.shape), resident(b3.shape),
        ],
        out_specs=out_spec,
        compiler_params=pltpu.CompilerParams(
            dimension_semantics=("parallel",)),   # shards batch grid on v7x's 2 TCs
        cost_estimate=pl.CostEstimate(
            flops=flops, transcendentals=transcendentals,
            bytes_accessed=bytes_accessed),
    )(x_pad, w1, b1, w2, b2, w3, b3)

    # Lane-dense padded slab -> slice back to the logical output.
    return out[:batch, :d_out]


def init_params(key, d_in, h1, h2, d_out):
    """Deterministic PyTorch-Linear-style init: U(-1/sqrt(fan_in), 1/sqrt(fan_in))."""
    ks = jax.random.split(key, 6)

    def linear(kw, kb, fan_in, fan_out):
        bound = 1.0 / jnp.sqrt(jnp.float32(fan_in))
        w = jax.random.uniform(kw, (fan_in, fan_out), jnp.float32, -bound, bound)
        b = jax.random.uniform(kb, (1, fan_out), jnp.float32, -bound, bound)
        return w, b

    w1, b1 = linear(ks[0], ks[1], d_in, h1)
    w2, b2 = linear(ks[2], ks[3], h1, h2)
    w3, b3 = linear(ks[4], ks[5], h2, d_out)
    return (w1, b1, w2, b2, w3, b3)


def reference_forward(x, params):
    w1, b1, w2, b2, w3, b3 = params
    h = jax.nn.sigmoid(x @ w1 + b1)
    h = jax.nn.sigmoid(h @ w2 + b2)
    return jax.nn.sigmoid(h @ w3 + b3)


if __name__ == "__main__":
    # Iris-like shapes: D_in=4 features, two hidden layers, D_out=3 classes.
    batch, d_in, h1, h2, d_out = 8, 4, 32, 32, 3

    key = jax.random.PRNGKey(0)
    k_x, k_p = jax.random.split(key)
    x = jax.random.normal(k_x, (batch, d_in), dtype=jnp.float32)
    params = init_params(k_p, d_in, h1, h2, d_out)

    # Pad weights/biases once (this is the "at init" cost the review calls out).
    padded = pad_params(params)

    out = custom_model_forward(x, padded, d_in, d_out)
    out = jax.block_until_ready(out)

    ref = reference_forward(x, params)
    assert out.shape == (batch, d_out)
    assert jnp.allclose(out, ref, atol=1e-5, rtol=1e-5)

    print("KERNEL_OK")
</pallas_src>

<mosaic_0001>
module attributes {stable_mosaic.version = 11 : i64} {
  func.func @mlp_kernel(%arg0: i32, %arg1: memref<8x128xf32, #tpu.memory_space<vmem>>, %arg2: memref<128x128xf32, #tpu.memory_space<vmem>>, %arg3: memref<1x128xf32, #tpu.memory_space<vmem>>, %arg4: memref<128x128xf32, #tpu.memory_space<vmem>>, %arg5: memref<1x128xf32, #tpu.memory_space<vmem>>, %arg6: memref<128x128xf32, #tpu.memory_space<vmem>>, %arg7: memref<1x128xf32, #tpu.memory_space<vmem>>, %arg8: memref<8x128xf32, #tpu.memory_space<vmem>>) attributes {dimension_semantics = [#tpu.dimension_semantics<parallel>], iteration_bounds = array<i64: 1>, scalar_prefetch = 0 : i64, scratch_operands = 0 : i64, tpu.core_type = #tpu.core_type<tc>, window_params = [{transform_indices = @transform_0, window_bounds = array<i64: 8, 128>}, {pipeline_mode = #tpu.pipeline_mode<synchronous>, transform_indices = @transform_1, window_bounds = array<i64: 128, 128>}, {pipeline_mode = #tpu.pipeline_mode<synchronous>, transform_indices = @transform_2, window_bounds = array<i64: 1, 128>}, {pipeline_mode = #tpu.pipeline_mode<synchronous>, transform_indices = @transform_3, window_bounds = array<i64: 128, 128>}, {pipeline_mode = #tpu.pipeline_mode<synchronous>, transform_indices = @transform_4, window_bounds = array<i64: 1, 128>}, {pipeline_mode = #tpu.pipeline_mode<synchronous>, transform_indices = @transform_5, window_bounds = array<i64: 128, 128>}, {pipeline_mode = #tpu.pipeline_mode<synchronous>, transform_indices = @transform_6, window_bounds = array<i64: 1, 128>}, {transform_indices = @transform_7, window_bounds = array<i64: 8, 128>}]} {
    %c0 = arith.constant 0 : index
    %c0_0 = arith.constant 0 : index
    %0 = vector.load %arg1[%c0, %c0_0] : memref<8x128xf32, #tpu.memory_space<vmem>>, vector<8x128xf32>
    %c0_1 = arith.constant 0 : index
    %c0_2 = arith.constant 0 : index
    %1 = vector.load %arg3[%c0_1, %c0_2] : memref<1x128xf32, #tpu.memory_space<vmem>>, vector<1x128xf32>
    %c0_3 = arith.constant 0 : index
    %c0_4 = arith.constant 0 : index
    %2 = vector.load %arg5[%c0_3, %c0_4] : memref<1x128xf32, #tpu.memory_space<vmem>>, vector<1x128xf32>
    %c0_5 = arith.constant 0 : index
    %c0_6 = arith.constant 0 : index
    %3 = vector.load %arg7[%c0_5, %c0_6] : memref<1x128xf32, #tpu.memory_space<vmem>>, vector<1x128xf32>
    %c0_7 = arith.constant 0 : index
    %c0_8 = arith.constant 0 : index
    %4 = vector.load %arg2[%c0_7, %c0_8] : memref<128x128xf32, #tpu.memory_space<vmem>>, vector<128x128xf32>
    %cst = arith.constant dense<0.000000e+00> : vector<8x128xf32>
    %5 = tpu.matmul %0, %4, %cst {dimension_numbers = #tpu.dot_dimension_numbers<[1], [0], [0], [1], [0, 0, 1, 1], [], []>} : vector<8x128xf32>, vector<128x128xf32>, vector<8x128xf32> -> vector<8x128xf32>
    %6 = vector.broadcast %1 : vector<1x128xf32> to vector<8x128xf32>
    %7 = arith.addf %5, %6 : vector<8x128xf32>
    %cst_9 = arith.constant 0.000000e+00 : f32
    %8 = vector.broadcast %cst_9 : f32 to vector<8x128xf32>
    %9 = arith.subf %8, %7 : vector<8x128xf32>
    %10 = math.exp %9 : vector<8x128xf32>
    %cst_10 = arith.constant 1.000000e+00 : f32
    %11 = vector.broadcast %cst_10 : f32 to vector<8x128xf32>
    %12 = arith.addf %11, %10 : vector<8x128xf32>
    %cst_11 = arith.constant 1.000000e+00 : f32
    %13 = vector.broadcast %cst_11 : f32 to vector<8x128xf32>
    %14 = arith.divf %13, %12 : vector<8x128xf32>
    %c0_12 = arith.constant 0 : index
    %c0_13 = arith.constant 0 : index
    %15 = vector.load %arg4[%c0_12, %c0_13] : memref<128x128xf32, #tpu.memory_space<vmem>>, vector<128x128xf32>
    %cst_14 = arith.constant dense<0.000000e+00> : vector<8x128xf32>
    %16 = tpu.matmul %14, %15, %cst_14 {dimension_numbers = #tpu.dot_dimension_numbers<[1], [0], [0], [1], [0, 0, 1, 1], [], []>} : vector<8x128xf32>, vector<128x128xf32>, vector<8x128xf32> -> vector<8x128xf32>
    %17 = vector.broadcast %2 : vector<1x128xf32> to vector<8x128xf32>
    %18 = arith.addf %16, %17 : vector<8x128xf32>
    %cst_15 = arith.constant 0.000000e+00 : f32
    %19 = vector.broadcast %cst_15 : f32 to vector<8x128xf32>
    %20 = arith.subf %19, %18 : vector<8x128xf32>
    %21 = math.exp %20 : vector<8x128xf32>
    %cst_16 = arith.constant 1.000000e+00 : f32
    %22 = vector.broadcast %cst_16 : f32 to vector<8x128xf32>
    %23 = arith.addf %22, %21 : vector<8x128xf32>
    %cst_17 = arith.constant 1.000000e+00 : f32
    %24 = vector.broadcast %cst_17 : f32 to vector<8x128xf32>
    %25 = arith.divf %24, %23 : vector<8x128xf32>
    %c0_18 = arith.constant 0 : index
    %c0_19 = arith.constant 0 : index
    %26 = vector.load %arg6[%c0_18, %c0_19] : memref<128x128xf32, #tpu.memory_space<vmem>>, vector<128x128xf32>
    %cst_20 = arith.constant dense<0.000000e+00> : vector<8x128xf32>
    %27 = tpu.matmul %25, %26, %cst_20 {dimension_numbers = #tpu.dot_dimension_numbers<[1], [0], [0], [1], [0, 0, 1, 1], [], []>} : vector<8x128xf32>, vector<128x128xf32>, vector<8x128xf32> -> vector<8x128xf32>
    %28 = vector.broadcast %3 : vector<1x128xf32> to vector<8x128xf32>
    %29 = arith.addf %27, %28 : vector<8x128xf32>
    %cst_21 = arith.constant 0.000000e+00 : f32
    %30 = vector.broadcast %cst_21 : f32 to vector<8x128xf32>
    %31 = arith.subf %30, %29 : vector<8x128xf32>
    %32 = math.exp %31 : vector<8x128xf32>
    %cst_22 = arith.constant 1.000000e+00 : f32
    %33 = vector.broadcast %cst_22 : f32 to vector<8x128xf32>
    %34 = arith.addf %33, %32 : vector<8x128xf32>
    %cst_23 = arith.constant 1.000000e+00 : f32
    %35 = vector.broadcast %cst_23 : f32 to vector<8x128xf32>
    %36 = arith.divf %35, %34 : vector<8x128xf32>
    %c0_24 = arith.constant 0 : index
    %c0_25 = arith.constant 0 : index
    %37 = vector.load %arg8[%c0_24, %c0_25] : memref<8x128xf32, #tpu.memory_space<vmem>>, vector<8x128xf32>
    tpu.vector_store %arg8[%c0_24, %c0_25], %36 {strides = array<i32>} : memref<8x128xf32, #tpu.memory_space<vmem>>, vector<8x128xf32>,
    return
  }
  func.func @transform_0(%arg0: i32) -> (i32, i32) {
    %c0_i32 = arith.constant 0 : i32
    %c0_i32_0 = arith.constant 0 : i32
    return %arg0, %c0_i32 : i32, i32
  }
  func.func @transform_1(%arg0: i32) -> (i32, i32) {
    %c0_i32 = arith.constant 0 : i32
    %c0_i32_0 = arith.constant 0 : i32
    %c0_i32_1 = arith.constant 0 : i32
    return %c0_i32, %c0_i32_0 : i32, i32
  }
  func.func @transform_2(%arg0: i32) -> (i32, i32) {
    %c0_i32 = arith.constant 0 : i32
    %c0_i32_0 = arith.constant 0 : i32
    %c0_i32_1 = arith.constant 0 : i32
    return %c0_i32, %c0_i32_0 : i32, i32
  }
  func.func @transform_3(%arg0: i32) -> (i32, i32) {
    %c0_i32 = arith.constant 0 : i32
    %c0_i32_0 = arith.constant 0 : i32
    %c0_i32_1 = arith.constant 0 : i32
    return %c0_i32, %c0_i32_0 : i32, i32
  }
  func.func @transform_4(%arg0: i32) -> (i32, i32) {
    %c0_i32 = arith.constant 0 : i32
    %c0_i32_0 = arith.constant 0 : i32
    %c0_i32_1 = arith.constant 0 : i32
    return %c0_i32, %c0_i32_0 : i32, i32
  }
  func.func @transform_5(%arg0: i32) -> (i32, i32) {
    %c0_i32 = arith.constant 0 : i32
    %c0_i32_0 = arith.constant 0 : i32
    %c0_i32_1 = arith.constant 0 : i32
    return %c0_i32, %c0_i32_0 : i32, i32
  }
  func.func @transform_6(%arg0: i32) -> (i32, i32) {
    %c0_i32 = arith.constant 0 : i32
    %c0_i32_0 = arith.constant 0 : i32
    %c0_i32_1 = arith.constant 0 : i32
    return %c0_i32, %c0_i32_0 : i32, i32
  }
  func.func @transform_7(%arg0: i32) -> (i32, i32) {
    %c0_i32 = arith.constant 0 : i32
    %c0_i32_0 = arith.constant 0 : i32
    return %arg0, %c0_i32 : i32, i32
  }
}

</mosaic_0001>

<llo_original>
// kernel: custom_model_forward.1
$region0: #{custom_model_forward.1}
  #allocation0 [shape = 'u32[]', space=smem, size = 0x4, offset = 0x4, fixed_abs, tag = 'smem constant byte address 0x4 - core index']
  #allocation1 [shape = 'u32[144,128]{1,0:T(1,128)}', space=vmem, size = 0x12000, scoped, tag = 'internal scratch']
  %s0 = inlined_call_operand.vmem [shape: f32[8,128], index: 0, kind: input, shape index: {}]
  %s1 = inlined_call_operand.hbm [shape: f32[128,128], index: 1, kind: input, shape index: {}]
  %s2 = inlined_call_operand.vmem [shape: f32[1,128], index: 2, kind: input, shape index: {}]
  %s3 = inlined_call_operand.hbm [shape: f32[128,128], index: 3, kind: input, shape index: {}]
  %s4 = inlined_call_operand.vmem [shape: f32[1,128], index: 4, kind: input, shape index: {}]
  %s5 = inlined_call_operand.hbm [shape: f32[128,128], index: 5, kind: input, shape index: {}]
  %s6 = inlined_call_operand.vmem [shape: f32[1,128], index: 6, kind: input, shape index: {}]
  %s7 = inlined_call_operand.vmem [shape: f32[8,128], index: 7, kind: output, shape index: {}]
  %s8 = sld [smem:[#allocation0]]
  $region50: #{custom_model_forward.1} parent=0
    _
  %s10 = ssub.s32 1, %s8
  %s11 = scalar_select 0, %s10, %s8
  $region1: #{custom_model_forward.1} parent=0
    #allocation2 [shape = 'u8[65536]{0}', space=vmem, size = 0x10000, scoped, tag = 'input window, operand 1, single buffered']
    #allocation3 [shape = 's32[1]{0}', space=sflag, size = 0x4, scoped, tag = 'scoped memory for custom_model_forward.1']
    #allocation4 [shape = 'u8[65536]{0}', space=vmem, size = 0x10000, scoped, tag = 'input window, operand 3, single buffered']
    #allocation5 [shape = 's32[1]{0}', space=sflag, size = 0x4, scoped, tag = 'scoped memory for custom_model_forward.1']
    #allocation6 [shape = 'u8[65536]{0}', space=vmem, size = 0x10000, scoped, tag = 'input window, operand 5, single buffered']
    %12 = vsyncpa [#allocation3], 0
    %13 = vsyncpa [#allocation5], 0
    // Predicated region
    $region2: #{custom_model_forward.1} parent=1 // pred_check
      _
    $region3: #{custom_model_forward.1} parent=1 // pred_check_branch
      %15 = sbr.rel (0) target = $region5
    $region4: #{custom_model_forward.1} parent=1 // pred_region
      _
    $region5: #{custom_model_forward.1} parent=1 // pred_fallthru
      _
    // Predicated region
    $region6: #{custom_model_forward.1} parent=1 // pred_check
      _
    $region7: #{custom_model_forward.1} parent=1 // pred_check_branch
      %17 = sbr.rel (0) target = $region9
    $region8: #{custom_model_forward.1} parent=1 // pred_region
      %s19 = ssub.s32 2048, 2048
      %20 = vsyncadd [#allocation3], %s19
      %s21 = sshll.u32 [#allocation2], 4
      %s22 = int_to_ptr.vmem [resolvable:$true] %s21
      %27 = dma.hbm_to_vmem [thread:$0]  %s1, 2048, %s22, [#allocation3], 128, 128, 8
    $region9: #{custom_model_forward.1} parent=1 // pred_fallthru
      _
    // Predicated region
    $region10: #{custom_model_forward.1} parent=1 // pred_check
      _
    $region11: #{custom_model_forward.1} parent=1 // pred_check_branch
      %29 = sbr.rel (0) target = $region13
    $region12: #{custom_model_forward.1} parent=1 // pred_region
      _
    $region13: #{custom_model_forward.1} parent=1 // pred_fallthru
      _
    // Predicated region
    $region14: #{custom_model_forward.1} parent=1 // pred_check
      _
    $region15: #{custom_model_forward.1} parent=1 // pred_check_branch
      %31 = sbr.rel (0) target = $region17
    $region16: #{custom_model_forward.1} parent=1 // pred_region
      %s33 = ssub.s32 2048, 2048
      %34 = vsyncadd [#allocation5], %s33
      %s35 = sshll.u32 [#allocation4], 4
      %s36 = int_to_ptr.vmem [resolvable:$true] %s35
      %41 = dma.hbm_to_vmem [thread:$0]  %s3, 2048, %s36, [#allocation5], 128, 128, 8
    $region17: #{custom_model_forward.1} parent=1 // pred_fallthru
      _
    // Predicated region
    $region18: #{custom_model_forward.1} parent=1 // pred_check
      _
    $region19: #{custom_model_forward.1} parent=1 // pred_check_branch
      %43 = sbr.rel (0) target = $region21
    $region20: #{custom_model_forward.1} parent=1 // pred_region
      _
    $region21: #{custom_model_forward.1} parent=1 // pred_fallthru
      _
    // Predicated region
    $region22: #{custom_model_forward.1} parent=1 // pred_check
      _
    $region23: #{custom_model_forward.1} parent=1 // pred_check_branch
      %45 = sbr.rel (0) target = $region25
    $region24: #{custom_model_forward.1} parent=1 // pred_region
      %s47 = ssub.s32 2048, 2048
      %48 = vsyncadd [#allocation5], %s47
      %s49 = sshll.u32 [#allocation6], 4
      %s50 = int_to_ptr.vmem [resolvable:$true] %s49
      %55 = dma.hbm_to_vmem [thread:$0]  %s5, 2048, %s50, [#allocation5], 128, 128, 8
    $region25: #{custom_model_forward.1} parent=1 // pred_fallthru
      _
    // Predicated region
    $region26: #{custom_model_forward.1} parent=1 // pred_check
      _
    $region27: #{custom_model_forward.1} parent=1 // pred_check_branch
      %57 = sbr.rel (0) target = $region29
    $region28: #{custom_model_forward.1} parent=1 // pred_region
      _
    $region29: #{custom_model_forward.1} parent=1 // pred_fallthru
      _
    // Predicated region
    $region30: #{custom_model_forward.1} parent=1 // pred_check
      _
    $region31: #{custom_model_forward.1} parent=1 // pred_check_branch
      %59 = sbr.rel (0) target = $region33
    $region32: #{custom_model_forward.1} parent=1 // pred_region
      %60 = dma.done [#allocation3], 2048
    $region33: #{custom_model_forward.1} parent=1 // pred_fallthru
      _
    // Predicated region
    $region34: #{custom_model_forward.1} parent=1 // pred_check
      _
    $region35: #{custom_model_forward.1} parent=1 // pred_check_branch
      %62 = sbr.rel (0) target = $region37
    $region36: #{custom_model_forward.1} parent=1 // pred_region
      %63 = dma.done [#allocation5], 2048
    $region37: #{custom_model_forward.1} parent=1 // pred_fallthru
      _
    // Predicated region
    $region38: #{custom_model_forward.1} parent=1 // pred_check
      _
    $region39: #{custom_model_forward.1} parent=1 // pred_check_branch
      %65 = sbr.rel (0) target = $region41
    $region40: #{custom_model_forward.1} parent=1 // pred_region
      %66 = dma.done [#allocation5], 2048
    $region41: #{custom_model_forward.1} parent=1 // pred_fallthru
      _
    %v67 = vld [vmem:[%s0] sm:$0xff]
    %v68 = vld [vmem:[%s2] sm:$0x1]
    %v69 = vld [vmem:[%s4] sm:$0x1]
    %v70 = vld [vmem:[%s6] sm:$0x1]
    %v71 = vld [vmem:[#allocation2] sm:$0xff]
    %v72 = vld [vmem:[#allocation2 + $0x8] sm:$0xff]
    %v73 = vld [vmem:[#allocation2 + $0x10] sm:$0xff]
    %v74 = vld [vmem:[#allocation2 + $0x18] sm:$0xff]
    %v75 = vld [vmem:[#allocation2 + $0x20] sm:$0xff]
    %v76 = vld [vmem:[#allocation2 + $0x28] sm:$0xff]
    %v77 = vld [vmem:[#allocation2 + $0x30] sm:$0xff]
    %v78 = vld [vmem:[#allocation2 + $0x38] sm:$0xff]
    %v79 = vld [vmem:[#allocation2 + $0x40] sm:$0xff]
    %v80 = vld [vmem:[#allocation2 + $0x48] sm:$0xff]
    %v81 = vld [vmem:[#allocation2 + $0x50] sm:$0xff]
    %v82 = vld [vmem:[#allocation2 + $0x58] sm:$0xff]
    %v83 = vld [vmem:[#allocation2 + $0x60] sm:$0xff]
    %v84 = vld [vmem:[#allocation2 + $0x68] sm:$0xff]
    %v85 = vld [vmem:[#allocation2 + $0x70] sm:$0xff]
    %v86 = vld [vmem:[#allocation2 + $0x78] sm:$0xff]
    %v88 = vlaneseq
    %v89 = vshrl.u32 %v88, 7
    %v90 = vsub.s32 0, %v89
    %v91 = vrot.slane %v68, %v90
    %93 = vmatprep.subr.mxu0 0.0
    %94 = vmatpush1.msra.mxu0 %v86
    %95 = vmatprep.subr.mxu0 0.0
    %96 = vmatpush1.msra.mxu0 %v85
    %97 = vmatprep.subr.mxu0 0.0
    %98 = vmatpush1.msra.mxu0 %v84
    %99 = vmatprep.subr.mxu0 0.0
    %100 = vmatpush1.msra.mxu0 %v83
    %101 = vmatprep.subr.mxu0 0.0
    %102 = vmatpush1.msra.mxu0 %v82
    %103 = vmatprep.subr.mxu0 0.0
    %104 = vmatpush1.msra.mxu0 %v81
    %105 = vmatprep.subr.mxu0 0.0
    %106 = vmatpush1.msra.mxu0 %v80
    %107 = vmatprep.subr.mxu0 0.0
    %108 = vmatpush1.msra.mxu0 %v79
    %109 = vmatprep.subr.mxu0 0.0
    %110 = vmatpush1.msra.mxu0 %v78
    %111 = vmatprep.subr.mxu0 0.0
    %112 = vmatpush1.msra.mxu0 %v77
    %113 = vmatprep.subr.mxu0 0.0
    %114 = vmatpush1.msra.mxu0 %v76
    %115 = vmatprep.subr.mxu0 0.0
    %116 = vmatpush1.msra.mxu0 %v75
    %117 = vmatprep.subr.mxu0 0.0
    %118 = vmatpush1.msra.mxu0 %v74
    %119 = vmatprep.subr.mxu0 0.0
    %120 = vmatpush1.msra.mxu0 %v73
    %121 = vmatprep.subr.mxu0 0.0
    %122 = vmatpush1.msra.mxu0 %v72
    %123 = vmatprep.subr.mxu0 0.0
    %124 = vmatpush1.msra.mxu0 %v71
    %125 = vmatprep.subr.mxu0 0.0
    %126 = vmatpush2.msra.mxu0 0.0
    %127 = vmatprep.subr.mxu0 0.0
    %128 = vmatpush2.msra.mxu0 0.0
    %129 = vmatprep.subr.mxu0 0.0
    %130 = vmatpush2.msra.mxu0 0.0
    %131 = vmatprep.subr.mxu0 0.0
    %132 = vmatpush2.msra.mxu0 0.0
    %133 = vmatprep.subr.mxu0 0.0
    %134 = vmatpush2.msra.mxu0 0.0
    %135 = vmatprep.subr.mxu0 0.0
    %136 = vmatpush2.msra.mxu0 0.0
    %137 = vmatprep.subr.mxu0 0.0
    %138 = vmatpush2.msra.mxu0 0.0
    %139 = vmatprep.subr.mxu0 0.0
    %140 = vmatpush2.msra.mxu0 0.0
    %141 = vmatprep.subr.mxu0 0.0
    %142 = vmatpush2.msra.mxu0 0.0
    %143 = vmatprep.subr.mxu0 0.0
    %144 = vmatpush2.msra.mxu0 0.0
    %145 = vmatprep.subr.mxu0 0.0
    %146 = vmatpush2.msra.mxu0 0.0
    %147 = vmatprep.subr.mxu0 0.0
    %148 = vmatpush2.msra.mxu0 0.0
    %149 = vmatprep.subr.mxu0 0.0
    %150 = vmatpush2.msra.mxu0 0.0
    %151 = vmatprep.subr.mxu0 0.0
    %152 = vmatpush2.msra.mxu0 0.0
    %153 = vmatprep.subr.mxu0 0.0
    %154 = vmatpush2.msra.mxu0 0.0
    %155 = vmatprep.subr.mxu0 0.0
    %156 = vmatpush2.msra.mxu0 0.0
    %157 = vmatprep.mubr.f32.mxu0 0.0
    %158 = vmatmul.mubr.f32.gmra.mxu0 %v67
    %v159 = vpop.f32.mrf.mxu0
    %v160 = vadd.f32 %v91, %v159
    %v161 = vpop.f32.mrf.mxu0
    %162 = vdwg.mxu0
    %v163 = vsub.f32 0.0, %v160
    %v164 = vmul.f32 %v163, 1.442695
    %v165 = vpow.pop %v164
    %v166 = vadd.f32 %v165, 1.0
    %v167 = vrcp.pop %v166
    %v168 = vmul.f32 1.0, %v167
    %v169 = vld [vmem:[#allocation4] sm:$0xff]
    %v170 = vld [vmem:[#allocation4 + $0x8] sm:$0xff]
    %v171 = vld [vmem:[#allocation4 + $0x10] sm:$0xff]
    %v172 = vld [vmem:[#allocation4 + $0x18] sm:$0xff]
    %v173 = vld [vmem:[#allocation4 + $0x20] sm:$0xff]
    %v174 = vld [vmem:[#allocation4 + $0x28] sm:$0xff]
    %v175 = vld [vmem:[#allocation4 + $0x30] sm:$0xff]
    %v176 = vld [vmem:[#allocation4 + $0x38] sm:$0xff]
    %v177 = vld [vmem:[#allocation4 + $0x40] sm:$0xff]
    %v178 = vld [vmem:[#allocation4 + $0x48] sm:$0xff]
    %v179 = vld [vmem:[#allocation4 + $0x50] sm:$0xff]
    %v180 = vld [vmem:[#allocation4 + $0x58] sm:$0xff]
    %v181 = vld [vmem:[#allocation4 + $0x60] sm:$0xff]
    %v182 = vld [vmem:[#allocation4 + $0x68] sm:$0xff]
    %v183 = vld [vmem:[#allocation4 + $0x70] sm:$0xff]
    %v184 = vld [vmem:[#allocation4 + $0x78] sm:$0xff]
    %v186 = vlaneseq
    %v187 = vshrl.u32 %v186, 7
    %v188 = vsub.s32 0, %v187
    %v189 = vrot.slane %v69, %v188
    %191 = vmatprep.subr.mxu0 0.0
    %192 = vmatpush1.msra.mxu0 %v184
    %193 = vmatprep.subr.mxu0 0.0
    %194 = vmatpush1.msra.mxu0 %v183
    %195 = vmatprep.subr.mxu0 0.0
    %196 = vmatpush1.msra.mxu0 %v182
    %197 = vmatprep.subr.mxu0 0.0
    %198 = vmatpush1.msra.mxu0 %v181
    %199 = vmatprep.subr.mxu0 0.0
    %200 = vmatpush1.msra.mxu0 %v180
    %201 = vmatprep.subr.mxu0 0.0
    %202 = vmatpush1.msra.mxu0 %v179
    %203 = vmatprep.subr.mxu0 0.0
    %204 = vmatpush1.msra.mxu0 %v178
    %205 = vmatprep.subr.mxu0 0.0
    %206 = vmatpush1.msra.mxu0 %v177
    %207 = vmatprep.subr.mxu0 0.0
    %208 = vmatpush1.msra.mxu0 %v176
    %209 = vmatprep.subr.mxu0 0.0
    %210 = vmatpush1.msra.mxu0 %v175
    %211 = vmatprep.subr.mxu0 0.0
    %212 = vmatpush1.msra.mxu0 %v174
    %213 = vmatprep.subr.mxu0 0.0
    %214 = vmatpush1.msra.mxu0 %v173
    %215 = vmatprep.subr.mxu0 0.0
    %216 = vmatpush1.msra.mxu0 %v172
    %217 = vmatprep.subr.mxu0 0.0
    %218 = vmatpush1.msra.mxu0 %v171
    %219 = vmatprep.subr.mxu0 0.0
    %220 = vmatpush1.msra.mxu0 %v170
    %221 = vmatprep.subr.mxu0 0.0
    %222 = vmatpush1.msra.mxu0 %v169
    %223 = vmatprep.subr.mxu0 0.0
    %224 = vmatpush2.msra.mxu0 0.0
    %225 = vmatprep.subr.mxu0 0.0
    %226 = vmatpush2.msra.mxu0 0.0
    %227 = vmatprep.subr.mxu0 0.0
    %228 = vmatpush2.msra.mxu0 0.0
    %229 = vmatprep.subr.mxu0 0.0
    %230 = vmatpush2.msra.mxu0 0.0
    %231 = vmatprep.subr.mxu0 0.0
    %232 = vmatpush2.msra.mxu0 0.0
    %233 = vmatprep.subr.mxu0 0.0
    %234 = vmatpush2.msra.mxu0 0.0
    %235 = vmatprep.subr.mxu0 0.0
    %236 = vmatpush2.msra.mxu0 0.0
    %237 = vmatprep.subr.mxu0 0.0
    %238 = vmatpush2.msra.mxu0 0.0
    %239 = vmatprep.subr.mxu0 0.0
    %240 = vmatpush2.msra.mxu0 0.0
    %241 = vmatprep.subr.mxu0 0.0
    %242 = vmatpush2.msra.mxu0 0.0
    %243 = vmatprep.subr.mxu0 0.0
    %244 = vmatpush2.msra.mxu0 0.0
    %245 = vmatprep.subr.mxu0 0.0
    %246 = vmatpush2.msra.mxu0 0.0
    %247 = vmatprep.subr.mxu0 0.0
    %248 = vmatpush2.msra.mxu0 0.0
    %249 = vmatprep.subr.mxu0 0.0
    %250 = vmatpush2.msra.mxu0 0.0
    %251 = vmatprep.subr.mxu0 0.0
    %252 = vmatpush2.msra.mxu0 0.0
    %253 = vmatprep.subr.mxu0 0.0
    %254 = vmatpush2.msra.mxu0 0.0
    %255 = vmatprep.mubr.f32.mxu0 0.0
    %256 = vmatmul.mubr.f32.gmra.mxu0 %v168
    %v257 = vpop.f32.mrf.mxu0
    %v258 = vadd.f32 %v189, %v257
    %v259 = vpop.f32.mrf.mxu0
    %260 = vdwg.mxu0
    %v261 = vsub.f32 0.0, %v258
    %v262 = vmul.f32 %v261, 1.442695
    %v263 = vpow.pop %v262
    %v264 = vadd.f32 %v263, 1.0
    %v265 = vrcp.pop %v264
    %v266 = vmul.f32 1.0, %v265
    %v267 = vld [vmem:[#allocation6] sm:$0xff]
    %v268 = vld [vmem:[#allocation6 + $0x8] sm:$0xff]
    %v269 = vld [vmem:[#allocation6 + $0x10] sm:$0xff]
    %v270 = vld [vmem:[#allocation6 + $0x18] sm:$0xff]
    %v271 = vld [vmem:[#allocation6 + $0x20] sm:$0xff]
    %v272 = vld [vmem:[#allocation6 + $0x28] sm:$0xff]
    %v273 = vld [vmem:[#allocation6 + $0x30] sm:$0xff]
    %v274 = vld [vmem:[#allocation6 + $0x38] sm:$0xff]
    %v275 = vld [vmem:[#allocation6 + $0x40] sm:$0xff]
    %v276 = vld [vmem:[#allocation6 + $0x48] sm:$0xff]
    %v277 = vld [vmem:[#allocation6 + $0x50] sm:$0xff]
    %v278 = vld [vmem:[#allocation6 + $0x58] sm:$0xff]
    %v279 = vld [vmem:[#allocation6 + $0x60] sm:$0xff]
    %v280 = vld [vmem:[#allocation6 + $0x68] sm:$0xff]
    %v281 = vld [vmem:[#allocation6 + $0x70] sm:$0xff]
    %v282 = vld [vmem:[#allocation6 + $0x78] sm:$0xff]
    %v284 = vlaneseq
    %v285 = vshrl.u32 %v284, 7
    %v286 = vsub.s32 0, %v285
    %v287 = vrot.slane %v70, %v286
    %289 = vmatprep.subr.mxu0 0.0
    %290 = vmatpush1.msra.mxu0 %v282
    %291 = vmatprep.subr.mxu0 0.0
    %292 = vmatpush1.msra.mxu0 %v281
    %293 = vmatprep.subr.mxu0 0.0
    %294 = vmatpush1.msra.mxu0 %v280
    %295 = vmatprep.subr.mxu0 0.0
    %296 = vmatpush1.msra.mxu0 %v279
    %297 = vmatprep.subr.mxu0 0.0
    %298 = vmatpush1.msra.mxu0 %v278
    %299 = vmatprep.subr.mxu0 0.0
    %300 = vmatpush1.msra.mxu0 %v277
    %301 = vmatprep.subr.mxu0 0.0
    %302 = vmatpush1.msra.mxu0 %v276
    %303 = vmatprep.subr.mxu0 0.0
    %304 = vmatpush1.msra.mxu0 %v275
    %305 = vmatprep.subr.mxu0 0.0
    %306 = vmatpush1.msra.mxu0 %v274
    %307 = vmatprep.subr.mxu0 0.0
    %308 = vmatpush1.msra.mxu0 %v273
    %309 = vmatprep.subr.mxu0 0.0
    %310 = vmatpush1.msra.mxu0 %v272
    %311 = vmatprep.subr.mxu0 0.0
    %312 = vmatpush1.msra.mxu0 %v271
    %313 = vmatprep.subr.mxu0 0.0
    %314 = vmatpush1.msra.mxu0 %v270
    %315 = vmatprep.subr.mxu0 0.0
    %316 = vmatpush1.msra.mxu0 %v269
    %317 = vmatprep.subr.mxu0 0.0
    %318 = vmatpush1.msra.mxu0 %v268
    %319 = vmatprep.subr.mxu0 0.0
    %320 = vmatpush1.msra.mxu0 %v267
    %321 = vmatprep.subr.mxu0 0.0
    %322 = vmatpush2.msra.mxu0 0.0
    %323 = vmatprep.subr.mxu0 0.0
    %324 = vmatpush2.msra.mxu0 0.0
    %325 = vmatprep.subr.mxu0 0.0
    %326 = vmatpush2.msra.mxu0 0.0
    %327 = vmatprep.subr.mxu0 0.0
    %328 = vmatpush2.msra.mxu0 0.0
    %329 = vmatprep.subr.mxu0 0.0
    %330 = vmatpush2.msra.mxu0 0.0
    %331 = vmatprep.subr.mxu0 0.0
    %332 = vmatpush2.msra.mxu0 0.0
    %333 = vmatprep.subr.mxu0 0.0
    %334 = vmatpush2.msra.mxu0 0.0
    %335 = vmatprep.subr.mxu0 0.0
    %336 = vmatpush2.msra.mxu0 0.0
    %337 = vmatprep.subr.mxu0 0.0
    %338 = vmatpush2.msra.mxu0 0.0
    %339 = vmatprep.subr.mxu0 0.0
    %340 = vmatpush2.msra.mxu0 0.0
    %341 = vmatprep.subr.mxu0 0.0
    %342 = vmatpush2.msra.mxu0 0.0
    %343 = vmatprep.subr.mxu0 0.0
    %344 = vmatpush2.msra.mxu0 0.0
    %345 = vmatprep.subr.mxu0 0.0
    %346 = vmatpush2.msra.mxu0 0.0
    %347 = vmatprep.subr.mxu0 0.0
    %348 = vmatpush2.msra.mxu0 0.0
    %349 = vmatprep.subr.mxu0 0.0
    %350 = vmatpush2.msra.mxu0 0.0
    %351 = vmatprep.subr.mxu0 0.0
    %352 = vmatpush2.msra.mxu0 0.0
    %353 = vmatprep.mubr.f32.mxu0 0.0
    %354 = vmatmul.mubr.f32.gmra.mxu0 %v266
    %v355 = vpop.f32.mrf.mxu0
    %v356 = vadd.f32 %v287, %v355
    %v357 = vpop.f32.mrf.mxu0
    %358 = vdwg.mxu0
    %v359 = vsub.f32 0.0, %v356
    %v360 = vmul.f32 %v359, 1.442695
    %v361 = vpow.pop %v360
    %v362 = vadd.f32 %v361, 1.0
    %v363 = vrcp.pop %v362
    %v364 = vmul.f32 1.0, %v363
    %365 = vst [vmem:[%s7] sm:$0xff] %v364
    // Predicated region
    $region42: #{custom_model_forward.1} parent=1 // pred_check
      _
    $region43: #{custom_model_forward.1} parent=1 // pred_check_branch
      %367 = sbr.rel (0) target = $region45
    $region44: #{custom_model_forward.1} parent=1 // pred_region
      _
    $region45: #{custom_model_forward.1} parent=1 // pred_fallthru
      _
    // Predicated region
    $region46: #{custom_model_forward.1} parent=1 // pred_check
      _
    $region47: #{custom_model_forward.1} parent=1 // pred_check_branch
      %369 = sbr.rel (0) target = $region49
    $region48: #{custom_model_forward.1} parent=1 // pred_region
      _
    $region49: #{custom_model_forward.1} parent=1 // pred_fallthru
      _
    %370 = vsyncpa [#allocation3], 1
    %371 = vsyncpa [#allocation5], 1

</llo_original>
